<compile_context>
chip_gen: v5e
topology: v5e:2x2
jax: 0.10.0
libtpu: 0.0.40
codegen_flags: <defaults>
</compile_context>

<pallas_src>
import functools

import jax
import jax.numpy as jnp
from jax import lax
from jax.experimental import pallas as pl
from jax.experimental.pallas import tpu as pltpu

_UNROLL_LIMIT = 16  # fully unroll the time loop up to this many steps


def _heat_rnn_kernel(x0_ref, w_x0_ref, w_rec_ref, b_x0_ref, b_rec_ref,
                     w_dec_ref, b_dec_ref, out_ref, h_slab, *, steps, hidden):
    B = x0_ref.shape[0]          # padded batch (multiple of 8)
    H = hidden
    nx = w_dec_ref.shape[1]
    cdt = w_rec_ref.dtype        # MXU operand dtype (bf16 in production)

    # Hoist bias broadcast out of the time loop (JAX does not CSE broadcasts).
    b_rec = jnp.broadcast_to(b_rec_ref[...], (B, 4 * H))

    def gru_step(g, h):
        # g = [i_r + h_r | i_z + h_z | i_n | h_n]   (f32, one fused vector)
        r = jax.nn.sigmoid(g[:, 0:H])
        z = jax.nn.sigmoid(g[:, H:2 * H])
        n = jnp.tanh(g[:, 2 * H:3 * H] + r * g[:, 3 * H:4 * H])
        return (1.0 - z) * n + z * h

    def gate_from_h(h):
        # Decoder folded into the recurrence: for t >= 1 the gate input is a
        # function of h only -> ONE fused MXU matmul per step.
        return jnp.dot(h.astype(cdt), w_rec_ref[...],
                       preferred_element_type=jnp.float32) + b_rec

    # Step-0 gate input from the real x0 (h0 == 0; b_hh terms pre-folded).
    g = (jnp.dot(x0_ref[...].astype(cdt), w_x0_ref[...],
                 preferred_element_type=jnp.float32)
         + jnp.broadcast_to(b_x0_ref[...], (B, 4 * H)))
    h = jnp.zeros((B, H), jnp.float32)

    if steps <= _UNROLL_LIMIT:
        # Short rollout: full unroll, static store offsets.
        for t in range(steps):
            h = gru_step(g, h)
            h_slab[t * B:(t + 1) * B, :] = h     # off the recurrence crit path
            if t + 1 < steps:
                g = gate_from_h(h)
    else:
        # Long rollout: bounded-unroll fori_loop keeps code size / live
        # ranges in check while leaving LLO scheduling visibility.
        def body(t, carry):
            g, h = carry
            h = gru_step(g, h)
            off = pl.multiple_of(t * B, B)
            h_slab[pl.ds(off, B), :] = h
            return gate_from_h(h), h             # last-iter g is wasted: ok

        lax.fori_loop(0, steps, body, (g, h), unroll=8)

    # Single batched decode for ALL steps: (steps*B, H) @ (H, nx), one
    # output writeback.  Row order is t-major, so no transpose in the wrapper.
    dec = jnp.dot(h_slab[...].astype(cdt), w_dec_ref[...],
                  preferred_element_type=jnp.float32)
    out_ref[...] = (dec + jnp.broadcast_to(b_dec_ref[...], (steps * B, nx))
                    ).astype(out_ref.dtype)


def heat_rnn_forward(x0, params, steps, mxu_dtype=jnp.bfloat16):
    """x0: (batch, nx) f32.  Returns preds: (steps, batch, nx) f32."""
    B, nx = x0.shape
    w_ih, w_hh, b_ih, b_hh, w_dec, b_dec = params
    H = w_hh.shape[0]

    # Decoder fold: for t >= 1, x_t = h_t @ w_dec + b_dec, hence
    #   x_t @ w_ih + b_ih = h_t @ (w_dec @ w_ih) + (b_dec @ w_ih + b_ih).
    p = w_dec @ w_ih                               # (H, 3H)
    q = b_dec @ w_ih                               # (1, 3H)

    # One fused recurrence matmul: h @ W_rec -> [i_r+h_r, i_z+h_z, i_n, h_n].
    w_rec = jnp.concatenate(
        [p[:, :2 * H] + w_hh[:, :2 * H],           # r, z : input + hidden
         p[:, 2 * H:],                             # i_n  (input part of n)
         w_hh[:, 2 * H:]],                         # h_n  (hidden part of n)
        axis=1)                                    # (H, 4H)
    b_rec = jnp.concatenate(
        [q[:, :2 * H] + b_ih[:, :2 * H] + b_hh[:, :2 * H],
         q[:, 2 * H:] + b_ih[:, 2 * H:],
         b_hh[:, 2 * H:]],
        axis=1)                                    # (1, 4H)

    # Step-0 projection (real x0, h0 = 0 so only b_hh shows up in h-terms).
    w_x0 = jnp.concatenate([w_ih, jnp.zeros((nx, H), w_ih.dtype)], axis=1)
    b_x0 = jnp.concatenate(
        [b_ih[:, :2 * H] + b_hh[:, :2 * H], b_ih[:, 2 * H:], b_hh[:, 2 * H:]],
        axis=1)                                    # (1, 4H)

    # Pad batch to a sublane multiple (8).
    Bp = max(8, -(-B // 8) * 8)
    x0p = jnp.zeros((Bp, nx), jnp.float32).at[:B, :].set(x0)

    # MXU operands in mxu_dtype (bf16 by default); biases stay f32.
    w_x0 = w_x0.astype(mxu_dtype)
    w_rec = w_rec.astype(mxu_dtype)
    w_dec_c = w_dec.astype(mxu_dtype)

    out = pl.pallas_call(
        functools.partial(_heat_rnn_kernel, steps=steps, hidden=H),
        out_shape=jax.ShapeDtypeStruct((steps * Bp, nx), jnp.float32),
        grid=(1,),
        in_specs=[
            pl.BlockSpec((Bp, nx), lambda i: (0, 0)),        # x0 (padded)
            pl.BlockSpec((nx, 4 * H), lambda i: (0, 0)),     # step-0 gate W
            pl.BlockSpec((H, 4 * H), lambda i: (0, 0)),      # recurrence W
            pl.BlockSpec((1, 4 * H), lambda i: (0, 0)),      # step-0 gate b
            pl.BlockSpec((1, 4 * H), lambda i: (0, 0)),      # recurrence b
            pl.BlockSpec((H, nx), lambda i: (0, 0)),         # decoder W^T
            pl.BlockSpec((1, nx), lambda i: (0, 0)),         # decoder b
        ],
        out_specs=pl.BlockSpec((steps * Bp, nx), lambda i: (0, 0)),
        scratch_shapes=[
            pltpu.VMEM((steps * Bp, H), jnp.float32),        # per-step h slab
        ],
        compiler_params=pltpu.CompilerParams(
            dimension_semantics=("arbitrary",),
            vmem_limit_bytes=32 * 1024 * 1024),
    )(x0p, w_x0, w_rec, b_x0, b_rec, w_dec_c, b_dec)

    # (steps*Bp, nx) rows are t-major -> (steps, Bp, nx); drop batch padding.
    return out.reshape(steps, Bp, nx)[:, :B, :]


def init_params(key, input_size, hidden_size):
    """Deterministic init matching PyTorch GRU/Linear parameter shapes.

    PyTorch stores weight_ih_l0 (3H, in), weight_hh_l0 (3H, H), decoder
    weight (in, H); we keep transposed versions so the kernel does x @ W.
    """
    k = jax.random.split(key, 6)
    bound = 1.0 / jnp.sqrt(hidden_size)
    w_ih = jax.random.uniform(k[0], (input_size, 3 * hidden_size),
                              jnp.float32, -bound, bound)
    w_hh = jax.random.uniform(k[1], (hidden_size, 3 * hidden_size),
                              jnp.float32, -bound, bound)
    b_ih = jax.random.uniform(k[2], (1, 3 * hidden_size),
                              jnp.float32, -bound, bound)
    b_hh = jax.random.uniform(k[3], (1, 3 * hidden_size),
                              jnp.float32, -bound, bound)
    w_dec = jax.random.uniform(k[4], (hidden_size, input_size),
                               jnp.float32, -bound, bound)
    b_dec = jax.random.uniform(k[5], (1, input_size),
                               jnp.float32, -bound, bound)
    return (w_ih, w_hh, b_ih, b_hh, w_dec, b_dec)


def heat_rnn_reference(x0, params, steps):
    """Pure-JAX reference of the PyTorch forward (for correctness check)."""
    w_ih, w_hh, b_ih, b_hh, w_dec, b_dec = params
    H = w_hh.shape[0]
    B = x0.shape[0]
    h = jnp.zeros((B, H), jnp.float32)
    x = x0
    preds = []
    for _ in range(steps):
        gi = x @ w_ih + b_ih
        gh = h @ w_hh + b_hh
        i_r, i_z, i_n = gi[:, :H], gi[:, H:2 * H], gi[:, 2 * H:]
        h_r, h_z, h_n = gh[:, :H], gh[:, H:2 * H], gh[:, 2 * H:]
        r = jax.nn.sigmoid(i_r + h_r)
        z = jax.nn.sigmoid(i_z + h_z)
        n = jnp.tanh(i_n + r * h_n)
        h = (1.0 - z) * n + z * h
        x = h @ w_dec + b_dec
        preds.append(x)
    return jnp.stack(preds)


if __name__ == "__main__":
    batch = 2
    nx = 16          # input_size (spatial grid points)
    hidden = 32      # GRU hidden size
    steps = 8        # rollout length

    key = jax.random.PRNGKey(0)
    k_x, k_p = jax.random.split(key)
    x0 = jax.random.uniform(k_x, (batch, nx), jnp.float32)
    params = init_params(k_p, nx, hidden)

    ref = heat_rnn_reference(x0, params, steps)

    # 1) f32 MXU path: validates the fused-gate / decoder-fold algebra.
    #    (Tolerance allows for TPU default matmul precision in the reference.)
    preds_f32 = jax.block_until_ready(
        heat_rnn_forward(x0, params, steps, mxu_dtype=jnp.float32))
    assert preds_f32.shape == (steps, batch, nx)
    assert jnp.allclose(preds_f32, ref, atol=1e-2, rtol=1e-2), "f32 mismatch"

    # 2) bf16 MXU path (default / production): looser tolerance per review.
    preds_bf16 = jax.block_until_ready(heat_rnn_forward(x0, params, steps))
    assert preds_bf16.shape == (steps, batch, nx)
    assert jnp.allclose(preds_bf16, ref, atol=5e-2, rtol=5e-2), "bf16 mismatch"

    # 3) Long rollout exercises the bounded-unroll fori_loop path.
    steps_long = 40
    preds_long = jax.block_until_ready(
        heat_rnn_forward(x0, params, steps_long, mxu_dtype=jnp.float32))
    ref_long = heat_rnn_reference(x0, params, steps_long)
    assert preds_long.shape == (steps_long, batch, nx)
    assert jnp.allclose(preds_long, ref_long, atol=1e-2, rtol=1e-2), \
        "long-rollout mismatch"

    print("KERNEL_OK")
</pallas_src>

<mosaic_0001>
module attributes {stable_mosaic.version = 11 : i64} {
  func.func @_heat_rnn_kernel(%arg0: i32, %arg1: memref<8x16xf32, #tpu.memory_space<vmem>>, %arg2: memref<16x128xf32, #tpu.memory_space<vmem>>, %arg3: memref<32x128xf32, #tpu.memory_space<vmem>>, %arg4: memref<1x128xf32, #tpu.memory_space<vmem>>, %arg5: memref<1x128xf32, #tpu.memory_space<vmem>>, %arg6: memref<32x16xf32, #tpu.memory_space<vmem>>, %arg7: memref<1x16xf32, #tpu.memory_space<vmem>>, %arg8: memref<64x16xf32, #tpu.memory_space<vmem>>, %arg9: memref<64x32xf32, #tpu.memory_space<vmem>>) attributes {dimension_semantics = [#tpu.dimension_semantics<arbitrary>], iteration_bounds = array<i64: 1>, scalar_prefetch = 0 : i64, scratch_operands = 1 : i64, tpu.core_type = #tpu.core_type<tc>, window_params = [{pipeline_mode = #tpu.pipeline_mode<synchronous>, transform_indices = @transform_0, window_bounds = array<i64: 8, 16>}, {pipeline_mode = #tpu.pipeline_mode<synchronous>, transform_indices = @transform_1, window_bounds = array<i64: 16, 128>}, {pipeline_mode = #tpu.pipeline_mode<synchronous>, transform_indices = @transform_2, window_bounds = array<i64: 32, 128>}, {pipeline_mode = #tpu.pipeline_mode<synchronous>, transform_indices = @transform_3, window_bounds = array<i64: 1, 128>}, {pipeline_mode = #tpu.pipeline_mode<synchronous>, transform_indices = @transform_4, window_bounds = array<i64: 1, 128>}, {pipeline_mode = #tpu.pipeline_mode<synchronous>, transform_indices = @transform_5, window_bounds = array<i64: 32, 16>}, {pipeline_mode = #tpu.pipeline_mode<synchronous>, transform_indices = @transform_6, window_bounds = array<i64: 1, 16>}, {pipeline_mode = #tpu.pipeline_mode<synchronous>, transform_indices = @transform_7, window_bounds = array<i64: 64, 16>}]} {
    %c0 = arith.constant 0 : index
    %c0_0 = arith.constant 0 : index
    %0 = vector.load %arg5[%c0, %c0_0] : memref<1x128xf32, #tpu.memory_space<vmem>>, vector<1x128xf32>
    %1 = vector.shape_cast %0 : vector<1x128xf32> to vector<1x128xf32>
    %2 = vector.broadcast %1 : vector<1x128xf32> to vector<8x128xf32>
    %c0_1 = arith.constant 0 : index
    %c0_2 = arith.constant 0 : index
    %3 = vector.load %arg1[%c0_1, %c0_2] : memref<8x16xf32, #tpu.memory_space<vmem>>, vector<8x16xf32>
    %c0_3 = arith.constant 0 : index
    %c0_4 = arith.constant 0 : index
    %4 = vector.load %arg2[%c0_3, %c0_4] : memref<16x128xf32, #tpu.memory_space<vmem>>, vector<16x128xf32>
    %cst = arith.constant dense<0.000000e+00> : vector<8x128xf32>
    %5 = tpu.matmul %3, %4, %cst {dimension_numbers = #tpu.dot_dimension_numbers<[1], [0], [0], [1], [0, 0, 1, 1], [], []>} : vector<8x16xf32>, vector<16x128xf32>, vector<8x128xf32> -> vector<8x128xf32>
    %c0_5 = arith.constant 0 : index
    %c0_6 = arith.constant 0 : index
    %6 = vector.load %arg4[%c0_5, %c0_6] : memref<1x128xf32, #tpu.memory_space<vmem>>, vector<1x128xf32>
    %7 = vector.shape_cast %6 : vector<1x128xf32> to vector<1x128xf32>
    %8 = vector.broadcast %7 : vector<1x128xf32> to vector<8x128xf32>
    %9 = arith.addf %5, %8 : vector<8x128xf32>
    %cst_7 = arith.constant 0.000000e+00 : f32
    %10 = vector.broadcast %cst_7 : f32 to vector<8x32xf32>
    %11 = vector.extract_strided_slice %9 {offsets = [0, 0], sizes = [8, 32], strides = [1, 1]} : vector<8x128xf32> to vector<8x32xf32>
    %12 = arith.negf %11 : vector<8x32xf32>
    %13 = math.exp %12 : vector<8x32xf32>
    %cst_8 = arith.constant 1.000000e+00 : f32
    %14 = vector.broadcast %cst_8 : f32 to vector<8x32xf32>
    %15 = arith.addf %14, %13 : vector<8x32xf32>
    %16 = arith.divf %14, %15 : vector<8x32xf32>
    %17 = vector.extract_strided_slice %9 {offsets = [0, 32], sizes = [8, 32], strides = [1, 1]} : vector<8x128xf32> to vector<8x32xf32>
    %18 = arith.negf %17 : vector<8x32xf32>
    %19 = math.exp %18 : vector<8x32xf32>
    %cst_9 = arith.constant 1.000000e+00 : f32
    %20 = vector.broadcast %cst_9 : f32 to vector<8x32xf32>
    %21 = arith.addf %20, %19 : vector<8x32xf32>
    %22 = arith.divf %20, %21 : vector<8x32xf32>
    %23 = vector.extract_strided_slice %9 {offsets = [0, 64], sizes = [8, 32], strides = [1, 1]} : vector<8x128xf32> to vector<8x32xf32>
    %24 = vector.extract_strided_slice %9 {offsets = [0, 96], sizes = [8, 32], strides = [1, 1]} : vector<8x128xf32> to vector<8x32xf32>
    %25 = arith.mulf %16, %24 : vector<8x32xf32>
    %26 = arith.addf %23, %25 : vector<8x32xf32>
    %27 = math.tanh %26 : vector<8x32xf32>
    %cst_10 = arith.constant 1.000000e+00 : f32
    %28 = vector.broadcast %cst_10 : f32 to vector<8x32xf32>
    %29 = arith.subf %28, %22 : vector<8x32xf32>
    %30 = arith.mulf %29, %27 : vector<8x32xf32>
    %31 = arith.mulf %22, %10 : vector<8x32xf32>
    %32 = arith.addf %30, %31 : vector<8x32xf32>
    %c0_11 = arith.constant 0 : index
    %c0_12 = arith.constant 0 : index
    %33 = vector.load %arg9[%c0_11, %c0_12] : memref<64x32xf32, #tpu.memory_space<vmem>>, vector<8x32xf32>
    tpu.vector_store %arg9[%c0_11, %c0_12], %32 {strides = array<i32>} : memref<64x32xf32, #tpu.memory_space<vmem>>, vector<8x32xf32>,
    %c0_13 = arith.constant 0 : index
    %c0_14 = arith.constant 0 : index
    %34 = vector.load %arg3[%c0_13, %c0_14] : memref<32x128xf32, #tpu.memory_space<vmem>>, vector<32x128xf32>
    %cst_15 = arith.constant dense<0.000000e+00> : vector<8x128xf32>
    %35 = tpu.matmul %32, %34, %cst_15 {dimension_numbers = #tpu.dot_dimension_numbers<[1], [0], [0], [1], [0, 0, 1, 1], [], []>} : vector<8x32xf32>, vector<32x128xf32>, vector<8x128xf32> -> vector<8x128xf32>
    %36 = arith.addf %35, %2 : vector<8x128xf32>
    %37 = vector.extract_strided_slice %36 {offsets = [0, 0], sizes = [8, 32], strides = [1, 1]} : vector<8x128xf32> to vector<8x32xf32>
    %38 = arith.negf %37 : vector<8x32xf32>
    %39 = math.exp %38 : vector<8x32xf32>
    %cst_16 = arith.constant 1.000000e+00 : f32
    %40 = vector.broadcast %cst_16 : f32 to vector<8x32xf32>
    %41 = arith.addf %40, %39 : vector<8x32xf32>
    %42 = arith.divf %40, %41 : vector<8x32xf32>
    %43 = vector.extract_strided_slice %36 {offsets = [0, 32], sizes = [8, 32], strides = [1, 1]} : vector<8x128xf32> to vector<8x32xf32>
    %44 = arith.negf %43 : vector<8x32xf32>
    %45 = math.exp %44 : vector<8x32xf32>
    %cst_17 = arith.constant 1.000000e+00 : f32
    %46 = vector.broadcast %cst_17 : f32 to vector<8x32xf32>
    %47 = arith.addf %46, %45 : vector<8x32xf32>
    %48 = arith.divf %46, %47 : vector<8x32xf32>
    %49 = vector.extract_strided_slice %36 {offsets = [0, 64], sizes = [8, 32], strides = [1, 1]} : vector<8x128xf32> to vector<8x32xf32>
    %50 = vector.extract_strided_slice %36 {offsets = [0, 96], sizes = [8, 32], strides = [1, 1]} : vector<8x128xf32> to vector<8x32xf32>
    %51 = arith.mulf %42, %50 : vector<8x32xf32>
    %52 = arith.addf %49, %51 : vector<8x32xf32>
    %53 = math.tanh %52 : vector<8x32xf32>
    %cst_18 = arith.constant 1.000000e+00 : f32
    %54 = vector.broadcast %cst_18 : f32 to vector<8x32xf32>
    %55 = arith.subf %54, %48 : vector<8x32xf32>
    %56 = arith.mulf %55, %53 : vector<8x32xf32>
    %57 = arith.mulf %48, %32 : vector<8x32xf32>
    %58 = arith.addf %56, %57 : vector<8x32xf32>
    %c8 = arith.constant 8 : index
    %c0_19 = arith.constant 0 : index
    %59 = vector.load %arg9[%c8, %c0_19] : memref<64x32xf32, #tpu.memory_space<vmem>>, vector<8x32xf32>
    tpu.vector_store %arg9[%c8, %c0_19], %58 {strides = array<i32>} : memref<64x32xf32, #tpu.memory_space<vmem>>, vector<8x32xf32>,
    %c0_20 = arith.constant 0 : index
    %c0_21 = arith.constant 0 : index
    %60 = vector.load %arg3[%c0_20, %c0_21] : memref<32x128xf32, #tpu.memory_space<vmem>>, vector<32x128xf32>
    %cst_22 = arith.constant dense<0.000000e+00> : vector<8x128xf32>
    %61 = tpu.matmul %58, %60, %cst_22 {dimension_numbers = #tpu.dot_dimension_numbers<[1], [0], [0], [1], [0, 0, 1, 1], [], []>} : vector<8x32xf32>, vector<32x128xf32>, vector<8x128xf32> -> vector<8x128xf32>
    %62 = arith.addf %61, %2 : vector<8x128xf32>
    %63 = vector.extract_strided_slice %62 {offsets = [0, 0], sizes = [8, 32], strides = [1, 1]} : vector<8x128xf32> to vector<8x32xf32>
    %64 = arith.negf %63 : vector<8x32xf32>
    %65 = math.exp %64 : vector<8x32xf32>
    %cst_23 = arith.constant 1.000000e+00 : f32
    %66 = vector.broadcast %cst_23 : f32 to vector<8x32xf32>
    %67 = arith.addf %66, %65 : vector<8x32xf32>
    %68 = arith.divf %66, %67 : vector<8x32xf32>
    %69 = vector.extract_strided_slice %62 {offsets = [0, 32], sizes = [8, 32], strides = [1, 1]} : vector<8x128xf32> to vector<8x32xf32>
    %70 = arith.negf %69 : vector<8x32xf32>
    %71 = math.exp %70 : vector<8x32xf32>
    %cst_24 = arith.constant 1.000000e+00 : f32
    %72 = vector.broadcast %cst_24 : f32 to vector<8x32xf32>
    %73 = arith.addf %72, %71 : vector<8x32xf32>
    %74 = arith.divf %72, %73 : vector<8x32xf32>
    %75 = vector.extract_strided_slice %62 {offsets = [0, 64], sizes = [8, 32], strides = [1, 1]} : vector<8x128xf32> to vector<8x32xf32>
    %76 = vector.extract_strided_slice %62 {offsets = [0, 96], sizes = [8, 32], strides = [1, 1]} : vector<8x128xf32> to vector<8x32xf32>
    %77 = arith.mulf %68, %76 : vector<8x32xf32>
    %78 = arith.addf %75, %77 : vector<8x32xf32>
    %79 = math.tanh %78 : vector<8x32xf32>
    %cst_25 = arith.constant 1.000000e+00 : f32
    %80 = vector.broadcast %cst_25 : f32 to vector<8x32xf32>
    %81 = arith.subf %80, %74 : vector<8x32xf32>
    %82 = arith.mulf %81, %79 : vector<8x32xf32>
    %83 = arith.mulf %74, %58 : vector<8x32xf32>
    %84 = arith.addf %82, %83 : vector<8x32xf32>
    %c16 = arith.constant 16 : index
    %c0_26 = arith.constant 0 : index
    %85 = vector.load %arg9[%c16, %c0_26] : memref<64x32xf32, #tpu.memory_space<vmem>>, vector<8x32xf32>
    tpu.vector_store %arg9[%c16, %c0_26], %84 {strides = array<i32>} : memref<64x32xf32, #tpu.memory_space<vmem>>, vector<8x32xf32>,
    %c0_27 = arith.constant 0 : index
    %c0_28 = arith.constant 0 : index
    %86 = vector.load %arg3[%c0_27, %c0_28] : memref<32x128xf32, #tpu.memory_space<vmem>>, vector<32x128xf32>
    %cst_29 = arith.constant dense<0.000000e+00> : vector<8x128xf32>
    %87 = tpu.matmul %84, %86, %cst_29 {dimension_numbers = #tpu.dot_dimension_numbers<[1], [0], [0], [1], [0, 0, 1, 1], [], []>} : vector<8x32xf32>, vector<32x128xf32>, vector<8x128xf32> -> vector<8x128xf32>
    %88 = arith.addf %87, %2 : vector<8x128xf32>
    %89 = vector.extract_strided_slice %88 {offsets = [0, 0], sizes = [8, 32], strides = [1, 1]} : vector<8x128xf32> to vector<8x32xf32>
    %90 = arith.negf %89 : vector<8x32xf32>
    %91 = math.exp %90 : vector<8x32xf32>
    %cst_30 = arith.constant 1.000000e+00 : f32
    %92 = vector.broadcast %cst_30 : f32 to vector<8x32xf32>
    %93 = arith.addf %92, %91 : vector<8x32xf32>
    %94 = arith.divf %92, %93 : vector<8x32xf32>
    %95 = vector.extract_strided_slice %88 {offsets = [0, 32], sizes = [8, 32], strides = [1, 1]} : vector<8x128xf32> to vector<8x32xf32>
    %96 = arith.negf %95 : vector<8x32xf32>
    %97 = math.exp %96 : vector<8x32xf32>
    %cst_31 = arith.constant 1.000000e+00 : f32
    %98 = vector.broadcast %cst_31 : f32 to vector<8x32xf32>
    %99 = arith.addf %98, %97 : vector<8x32xf32>
    %100 = arith.divf %98, %99 : vector<8x32xf32>
    %101 = vector.extract_strided_slice %88 {offsets = [0, 64], sizes = [8, 32], strides = [1, 1]} : vector<8x128xf32> to vector<8x32xf32>
    %102 = vector.extract_strided_slice %88 {offsets = [0, 96], sizes = [8, 32], strides = [1, 1]} : vector<8x128xf32> to vector<8x32xf32>
    %103 = arith.mulf %94, %102 : vector<8x32xf32>
    %104 = arith.addf %101, %103 : vector<8x32xf32>
    %105 = math.tanh %104 : vector<8x32xf32>
    %cst_32 = arith.constant 1.000000e+00 : f32
    %106 = vector.broadcast %cst_32 : f32 to vector<8x32xf32>
    %107 = arith.subf %106, %100 : vector<8x32xf32>
    %108 = arith.mulf %107, %105 : vector<8x32xf32>
    %109 = arith.mulf %100, %84 : vector<8x32xf32>
    %110 = arith.addf %108, %109 : vector<8x32xf32>
    %c24 = arith.constant 24 : index
    %c0_33 = arith.constant 0 : index
    %111 = vector.load %arg9[%c24, %c0_33] : memref<64x32xf32, #tpu.memory_space<vmem>>, vector<8x32xf32>
    tpu.vector_store %arg9[%c24, %c0_33], %110 {strides = array<i32>} : memref<64x32xf32, #tpu.memory_space<vmem>>, vector<8x32xf32>,
    %c0_34 = arith.constant 0 : index
    %c0_35 = arith.constant 0 : index
    %112 = vector.load %arg3[%c0_34, %c0_35] : memref<32x128xf32, #tpu.memory_space<vmem>>, vector<32x128xf32>
    %cst_36 = arith.constant dense<0.000000e+00> : vector<8x128xf32>
    %113 = tpu.matmul %110, %112, %cst_36 {dimension_numbers = #tpu.dot_dimension_numbers<[1], [0], [0], [1], [0, 0, 1, 1], [], []>} : vector<8x32xf32>, vector<32x128xf32>, vector<8x128xf32> -> vector<8x128xf32>
    %114 = arith.addf %113, %2 : vector<8x128xf32>
    %115 = vector.extract_strided_slice %114 {offsets = [0, 0], sizes = [8, 32], strides = [1, 1]} : vector<8x128xf32> to vector<8x32xf32>
    %116 = arith.negf %115 : vector<8x32xf32>
    %117 = math.exp %116 : vector<8x32xf32>
    %cst_37 = arith.constant 1.000000e+00 : f32
    %118 = vector.broadcast %cst_37 : f32 to vector<8x32xf32>
    %119 = arith.addf %118, %117 : vector<8x32xf32>
    %120 = arith.divf %118, %119 : vector<8x32xf32>
    %121 = vector.extract_strided_slice %114 {offsets = [0, 32], sizes = [8, 32], strides = [1, 1]} : vector<8x128xf32> to vector<8x32xf32>
    %122 = arith.negf %121 : vector<8x32xf32>
    %123 = math.exp %122 : vector<8x32xf32>
    %cst_38 = arith.constant 1.000000e+00 : f32
    %124 = vector.broadcast %cst_38 : f32 to vector<8x32xf32>
    %125 = arith.addf %124, %123 : vector<8x32xf32>
    %126 = arith.divf %124, %125 : vector<8x32xf32>
    %127 = vector.extract_strided_slice %114 {offsets = [0, 64], sizes = [8, 32], strides = [1, 1]} : vector<8x128xf32> to vector<8x32xf32>
    %128 = vector.extract_strided_slice %114 {offsets = [0, 96], sizes = [8, 32], strides = [1, 1]} : vector<8x128xf32> to vector<8x32xf32>
    %129 = arith.mulf %120, %128 : vector<8x32xf32>
    %130 = arith.addf %127, %129 : vector<8x32xf32>
    %131 = math.tanh %130 : vector<8x32xf32>
    %cst_39 = arith.constant 1.000000e+00 : f32
    %132 = vector.broadcast %cst_39 : f32 to vector<8x32xf32>
    %133 = arith.subf %132, %126 : vector<8x32xf32>
    %134 = arith.mulf %133, %131 : vector<8x32xf32>
    %135 = arith.mulf %126, %110 : vector<8x32xf32>
    %136 = arith.addf %134, %135 : vector<8x32xf32>
    %c32 = arith.constant 32 : index
    %c0_40 = arith.constant 0 : index
    %137 = vector.load %arg9[%c32, %c0_40] : memref<64x32xf32, #tpu.memory_space<vmem>>, vector<8x32xf32>
    tpu.vector_store %arg9[%c32, %c0_40], %136 {strides = array<i32>} : memref<64x32xf32, #tpu.memory_space<vmem>>, vector<8x32xf32>,
    %c0_41 = arith.constant 0 : index
    %c0_42 = arith.constant 0 : index
    %138 = vector.load %arg3[%c0_41, %c0_42] : memref<32x128xf32, #tpu.memory_space<vmem>>, vector<32x128xf32>
    %cst_43 = arith.constant dense<0.000000e+00> : vector<8x128xf32>
    %139 = tpu.matmul %136, %138, %cst_43 {dimension_numbers = #tpu.dot_dimension_numbers<[1], [0], [0], [1], [0, 0, 1, 1], [], []>} : vector<8x32xf32>, vector<32x128xf32>, vector<8x128xf32> -> vector<8x128xf32>
    %140 = arith.addf %139, %2 : vector<8x128xf32>
    %141 = vector.extract_strided_slice %140 {offsets = [0, 0], sizes = [8, 32], strides = [1, 1]} : vector<8x128xf32> to vector<8x32xf32>
    %142 = arith.negf %141 : vector<8x32xf32>
    %143 = math.exp %142 : vector<8x32xf32>
    %cst_44 = arith.constant 1.000000e+00 : f32
    %144 = vector.broadcast %cst_44 : f32 to vector<8x32xf32>
    %145 = arith.addf %144, %143 : vector<8x32xf32>
    %146 = arith.divf %144, %145 : vector<8x32xf32>
    %147 = vector.extract_strided_slice %140 {offsets = [0, 32], sizes = [8, 32], strides = [1, 1]} : vector<8x128xf32> to vector<8x32xf32>
    %148 = arith.negf %147 : vector<8x32xf32>
    %149 = math.exp %148 : vector<8x32xf32>
    %cst_45 = arith.constant 1.000000e+00 : f32
    %150 = vector.broadcast %cst_45 : f32 to vector<8x32xf32>
    %151 = arith.addf %150, %149 : vector<8x32xf32>
    %152 = arith.divf %150, %151 : vector<8x32xf32>
    %153 = vector.extract_strided_slice %140 {offsets = [0, 64], sizes = [8, 32], strides = [1, 1]} : vector<8x128xf32> to vector<8x32xf32>
    %154 = vector.extract_strided_slice %140 {offsets = [0, 96], sizes = [8, 32], strides = [1, 1]} : vector<8x128xf32> to vector<8x32xf32>
    %155 = arith.mulf %146, %154 : vector<8x32xf32>
    %156 = arith.addf %153, %155 : vector<8x32xf32>
    %157 = math.tanh %156 : vector<8x32xf32>
    %cst_46 = arith.constant 1.000000e+00 : f32
    %158 = vector.broadcast %cst_46 : f32 to vector<8x32xf32>
    %159 = arith.subf %158, %152 : vector<8x32xf32>
    %160 = arith.mulf %159, %157 : vector<8x32xf32>
    %161 = arith.mulf %152, %136 : vector<8x32xf32>
    %162 = arith.addf %160, %161 : vector<8x32xf32>
    %c40 = arith.constant 40 : index
    %c0_47 = arith.constant 0 : index
    %163 = vector.load %arg9[%c40, %c0_47] : memref<64x32xf32, #tpu.memory_space<vmem>>, vector<8x32xf32>
    tpu.vector_store %arg9[%c40, %c0_47], %162 {strides = array<i32>} : memref<64x32xf32, #tpu.memory_space<vmem>>, vector<8x32xf32>,
    %c0_48 = arith.constant 0 : index
    %c0_49 = arith.constant 0 : index
    %164 = vector.load %arg3[%c0_48, %c0_49] : memref<32x128xf32, #tpu.memory_space<vmem>>, vector<32x128xf32>
    %cst_50 = arith.constant dense<0.000000e+00> : vector<8x128xf32>
    %165 = tpu.matmul %162, %164, %cst_50 {dimension_numbers = #tpu.dot_dimension_numbers<[1], [0], [0], [1], [0, 0, 1, 1], [], []>} : vector<8x32xf32>, vector<32x128xf32>, vector<8x128xf32> -> vector<8x128xf32>
    %166 = arith.addf %165, %2 : vector<8x128xf32>
    %167 = vector.extract_strided_slice %166 {offsets = [0, 0], sizes = [8, 32], strides = [1, 1]} : vector<8x128xf32> to vector<8x32xf32>
    %168 = arith.negf %167 : vector<8x32xf32>
    %169 = math.exp %168 : vector<8x32xf32>
    %cst_51 = arith.constant 1.000000e+00 : f32
    %170 = vector.broadcast %cst_51 : f32 to vector<8x32xf32>
    %171 = arith.addf %170, %169 : vector<8x32xf32>
    %172 = arith.divf %170, %171 : vector<8x32xf32>
    %173 = vector.extract_strided_slice %166 {offsets = [0, 32], sizes = [8, 32], strides = [1, 1]} : vector<8x128xf32> to vector<8x32xf32>
    %174 = arith.negf %173 : vector<8x32xf32>
    %175 = math.exp %174 : vector<8x32xf32>
    %cst_52 = arith.constant 1.000000e+00 : f32
    %176 = vector.broadcast %cst_52 : f32 to vector<8x32xf32>
    %177 = arith.addf %176, %175 : vector<8x32xf32>
    %178 = arith.divf %176, %177 : vector<8x32xf32>
    %179 = vector.extract_strided_slice %166 {offsets = [0, 64], sizes = [8, 32], strides = [1, 1]} : vector<8x128xf32> to vector<8x32xf32>
    %180 = vector.extract_strided_slice %166 {offsets = [0, 96], sizes = [8, 32], strides = [1, 1]} : vector<8x128xf32> to vector<8x32xf32>
    %181 = arith.mulf %172, %180 : vector<8x32xf32>
    %182 = arith.addf %179, %181 : vector<8x32xf32>
    %183 = math.tanh %182 : vector<8x32xf32>
    %cst_53 = arith.constant 1.000000e+00 : f32
    %184 = vector.broadcast %cst_53 : f32 to vector<8x32xf32>
    %185 = arith.subf %184, %178 : vector<8x32xf32>
    %186 = arith.mulf %185, %183 : vector<8x32xf32>
    %187 = arith.mulf %178, %162 : vector<8x32xf32>
    %188 = arith.addf %186, %187 : vector<8x32xf32>
    %c48 = arith.constant 48 : index
    %c0_54 = arith.constant 0 : index
    %189 = vector.load %arg9[%c48, %c0_54] : memref<64x32xf32, #tpu.memory_space<vmem>>, vector<8x32xf32>
    tpu.vector_store %arg9[%c48, %c0_54], %188 {strides = array<i32>} : memref<64x32xf32, #tpu.memory_space<vmem>>, vector<8x32xf32>,
    %c0_55 = arith.constant 0 : index
    %c0_56 = arith.constant 0 : index
    %190 = vector.load %arg3[%c0_55, %c0_56] : memref<32x128xf32, #tpu.memory_space<vmem>>, vector<32x128xf32>
    %cst_57 = arith.constant dense<0.000000e+00> : vector<8x128xf32>
    %191 = tpu.matmul %188, %190, %cst_57 {dimension_numbers = #tpu.dot_dimension_numbers<[1], [0], [0], [1], [0, 0, 1, 1], [], []>} : vector<8x32xf32>, vector<32x128xf32>, vector<8x128xf32> -> vector<8x128xf32>
    %192 = arith.addf %191, %2 : vector<8x128xf32>
    %193 = vector.extract_strided_slice %192 {offsets = [0, 0], sizes = [8, 32], strides = [1, 1]} : vector<8x128xf32> to vector<8x32xf32>
    %194 = arith.negf %193 : vector<8x32xf32>
    %195 = math.exp %194 : vector<8x32xf32>
    %cst_58 = arith.constant 1.000000e+00 : f32
    %196 = vector.broadcast %cst_58 : f32 to vector<8x32xf32>
    %197 = arith.addf %196, %195 : vector<8x32xf32>
    %198 = arith.divf %196, %197 : vector<8x32xf32>
    %199 = vector.extract_strided_slice %192 {offsets = [0, 32], sizes = [8, 32], strides = [1, 1]} : vector<8x128xf32> to vector<8x32xf32>
    %200 = arith.negf %199 : vector<8x32xf32>
    %201 = math.exp %200 : vector<8x32xf32>
    %cst_59 = arith.constant 1.000000e+00 : f32
    %202 = vector.broadcast %cst_59 : f32 to vector<8x32xf32>
    %203 = arith.addf %202, %201 : vector<8x32xf32>
    %204 = arith.divf %202, %203 : vector<8x32xf32>
    %205 = vector.extract_strided_slice %192 {offsets = [0, 64], sizes = [8, 32], strides = [1, 1]} : vector<8x128xf32> to vector<8x32xf32>
    %206 = vector.extract_strided_slice %192 {offsets = [0, 96], sizes = [8, 32], strides = [1, 1]} : vector<8x128xf32> to vector<8x32xf32>
    %207 = arith.mulf %198, %206 : vector<8x32xf32>
    %208 = arith.addf %205, %207 : vector<8x32xf32>
    %209 = math.tanh %208 : vector<8x32xf32>
    %cst_60 = arith.constant 1.000000e+00 : f32
    %210 = vector.broadcast %cst_60 : f32 to vector<8x32xf32>
    %211 = arith.subf %210, %204 : vector<8x32xf32>
    %212 = arith.mulf %211, %209 : vector<8x32xf32>
    %213 = arith.mulf %204, %188 : vector<8x32xf32>
    %214 = arith.addf %212, %213 : vector<8x32xf32>
    %c56 = arith.constant 56 : index
    %c0_61 = arith.constant 0 : index
    %215 = vector.load %arg9[%c56, %c0_61] : memref<64x32xf32, #tpu.memory_space<vmem>>, vector<8x32xf32>
    tpu.vector_store %arg9[%c56, %c0_61], %214 {strides = array<i32>} : memref<64x32xf32, #tpu.memory_space<vmem>>, vector<8x32xf32>,
    %c0_62 = arith.constant 0 : index
    %c0_63 = arith.constant 0 : index
    %216 = vector.load %arg9[%c0_62, %c0_63] : memref<64x32xf32, #tpu.memory_space<vmem>>, vector<64x32xf32>
    %c0_64 = arith.constant 0 : index
    %c0_65 = arith.constant 0 : index
    %217 = vector.load %arg6[%c0_64, %c0_65] : memref<32x16xf32, #tpu.memory_space<vmem>>, vector<32x16xf32>
    %cst_66 = arith.constant dense<0.000000e+00> : vector<64x16xf32>
    %218 = tpu.matmul %216, %217, %cst_66 {dimension_numbers = #tpu.dot_dimension_numbers<[1], [0], [0], [1], [0, 0, 1, 1], [], []>} : vector<64x32xf32>, vector<32x16xf32>, vector<64x16xf32> -> vector<64x16xf32>
    %c0_67 = arith.constant 0 : index
    %c0_68 = arith.constant 0 : index
    %219 = vector.load %arg7[%c0_67, %c0_68] : memref<1x16xf32, #tpu.memory_space<vmem>>, vector<1x16xf32>
    %220 = vector.shape_cast %219 : vector<1x16xf32> to vector<1x16xf32>
    %221 = vector.broadcast %220 : vector<1x16xf32> to vector<64x16xf32>
    %222 = arith.addf %218, %221 : vector<64x16xf32>
    %c0_69 = arith.constant 0 : index
    %c0_70 = arith.constant 0 : index
    %223 = vector.load %arg8[%c0_69, %c0_70] : memref<64x16xf32, #tpu.memory_space<vmem>>, vector<64x16xf32>
    tpu.vector_store %arg8[%c0_69, %c0_70], %222 {strides = array<i32>} : memref<64x16xf32, #tpu.memory_space<vmem>>, vector<64x16xf32>,
    return
  }
  func.func @transform_0(%arg0: i32) -> (i32, i32) {
    %c0_i32 = arith.constant 0 : i32
    %c0_i32_0 = arith.constant 0 : i32
    %c0_i32_1 = arith.constant 0 : i32
    return %c0_i32, %c0_i32_0 : i32, i32
  }
  func.func @transform_1(%arg0: i32) -> (i32, i32) {
    %c0_i32 = arith.constant 0 : i32
    %c0_i32_0 = arith.constant 0 : i32
    %c0_i32_1 = arith.constant 0 : i32
    return %c0_i32, %c0_i32_0 : i32, i32
  }
  func.func @transform_2(%arg0: i32) -> (i32, i32) {
    %c0_i32 = arith.constant 0 : i32
    %c0_i32_0 = arith.constant 0 : i32
    %c0_i32_1 = arith.constant 0 : i32
    return %c0_i32, %c0_i32_0 : i32, i32
  }
  func.func @transform_3(%arg0: i32) -> (i32, i32) {
    %c0_i32 = arith.constant 0 : i32
    %c0_i32_0 = arith.constant 0 : i32
    %c0_i32_1 = arith.constant 0 : i32
    return %c0_i32, %c0_i32_0 : i32, i32
  }
  func.func @transform_4(%arg0: i32) -> (i32, i32) {
    %c0_i32 = arith.constant 0 : i32
    %c0_i32_0 = arith.constant 0 : i32
    %c0_i32_1 = arith.constant 0 : i32
    return %c0_i32, %c0_i32_0 : i32, i32
  }
  func.func @transform_5(%arg0: i32) -> (i32, i32) {
    %c0_i32 = arith.constant 0 : i32
    %c0_i32_0 = arith.constant 0 : i32
    %c0_i32_1 = arith.constant 0 : i32
    return %c0_i32, %c0_i32_0 : i32, i32
  }
  func.func @transform_6(%arg0: i32) -> (i32, i32) {
    %c0_i32 = arith.constant 0 : i32
    %c0_i32_0 = arith.constant 0 : i32
    %c0_i32_1 = arith.constant 0 : i32
    return %c0_i32, %c0_i32_0 : i32, i32
  }
  func.func @transform_7(%arg0: i32) -> (i32, i32) {
    %c0_i32 = arith.constant 0 : i32
    %c0_i32_0 = arith.constant 0 : i32
    %c0_i32_1 = arith.constant 0 : i32
    return %c0_i32, %c0_i32_0 : i32, i32
  }
}

</mosaic_0001>

<llo_original>
// kernel: tpu_custom_call.1
$region0: #{tpu_custom_call.1}
  #allocation0 [shape = 'u32[]', space=smem, size = 0x4, offset = 0x4, fixed_abs, tag = 'smem constant byte address 0x4 - core index']
  #allocation1 [shape = 'u32[72,128]{1,0:T(1,128)}', space=vmem, size = 0x9000, scoped, tag = 'internal scratch']
  #allocation2 [shape = 'f32[64,32]{1,0:T(8,128)}', space=vmem, size = 0x8000, scoped, tag = 'scratch operand']
  %s0 = inlined_call_operand.hbm [shape: f32[8,16], index: 0, kind: input, shape index: {}]
  %s1 = inlined_call_operand.vmem [shape: f32[16,128], index: 1, kind: input, shape index: {}]
  %s2 = inlined_call_operand.vmem [shape: f32[32,128], index: 2, kind: input, shape index: {}]
  %s3 = inlined_call_operand.vmem [shape: f32[1,128], index: 3, kind: input, shape index: {}]
  %s4 = inlined_call_operand.vmem [shape: f32[1,128], index: 4, kind: input, shape index: {}]
  %s5 = inlined_call_operand.vmem [shape: f32[32,16], index: 5, kind: input, shape index: {}]
  %s6 = inlined_call_operand.vmem [shape: f32[1,16], index: 6, kind: input, shape index: {}]
  %s7 = inlined_call_operand.vmem [shape: f32[64,16], index: 7, kind: output, shape index: {}]
  %s8 = sld [smem:[#allocation0]]
  $region42: #{tpu_custom_call.1} parent=0
    _
  %s10 = ssub.s32 1, %s8
  %s11 = scalar_select 0, %s10, %s8
  $region1: #{tpu_custom_call.1} parent=0
    #allocation3 [shape = 'u8[4096]{0}', space=vmem, size = 0x1000, scoped, tag = 'input window, operand 0, single buffered']
    #allocation4 [shape = 's32[1]{0}', space=sflag, size = 0x4, scoped, tag = 'scoped memory for tpu_custom_call.1']
    %12 = vsyncpa [#allocation4], 0
    // Predicated region
    $region2: #{tpu_custom_call.1} parent=1 // pred_check
      _
    $region3: #{tpu_custom_call.1} parent=1 // pred_check_branch
      %14 = sbr.rel (0) target = $region5
    $region4: #{tpu_custom_call.1} parent=1 // pred_region
      %16 = vsyncadd [#allocation4], 0
      %s18 = sshll.u32 %s0, 4
      %s19 = int_to_ptr.hbm [resolvable:$true] %s18
      %s20 = sshll.u32 [#allocation3], 4
      %s21 = int_to_ptr.vmem [resolvable:$true] %s20
      %23 = dma.hbm_to_vmem [thread:$0]  %s19, 128, %s21, [#allocation4]
    $region5: #{tpu_custom_call.1} parent=1 // pred_fallthru
      _
    // Predicated region
    $region6: #{tpu_custom_call.1} parent=1 // pred_check
      _
    $region7: #{tpu_custom_call.1} parent=1 // pred_check_branch
      %25 = sbr.rel (0) target = $region9
    $region8: #{tpu_custom_call.1} parent=1 // pred_region
      _
    $region9: #{tpu_custom_call.1} parent=1 // pred_fallthru
      _
    // Predicated region
    $region10: #{tpu_custom_call.1} parent=1 // pred_check
      _
    $region11: #{tpu_custom_call.1} parent=1 // pred_check_branch
      %27 = sbr.rel (0) target = $region13
    $region12: #{tpu_custom_call.1} parent=1 // pred_region
      _
    $region13: #{tpu_custom_call.1} parent=1 // pred_fallthru
      _
    // Predicated region
    $region14: #{tpu_custom_call.1} parent=1 // pred_check
      _
    $region15: #{tpu_custom_call.1} parent=1 // pred_check_branch
      %29 = sbr.rel (0) target = $region17
    $region16: #{tpu_custom_call.1} parent=1 // pred_region
      _
    $region17: #{tpu_custom_call.1} parent=1 // pred_fallthru
      _
    // Predicated region
    $region18: #{tpu_custom_call.1} parent=1 // pred_check
      _
    $region19: #{tpu_custom_call.1} parent=1 // pred_check_branch
      %31 = sbr.rel (0) target = $region21
    $region20: #{tpu_custom_call.1} parent=1 // pred_region
      _
    $region21: #{tpu_custom_call.1} parent=1 // pred_fallthru
      _
    // Predicated region
    $region22: #{tpu_custom_call.1} parent=1 // pred_check
      _
    $region23: #{tpu_custom_call.1} parent=1 // pred_check_branch
      %33 = sbr.rel (0) target = $region25
    $region24: #{tpu_custom_call.1} parent=1 // pred_region
      _
    $region25: #{tpu_custom_call.1} parent=1 // pred_fallthru
      _
    // Predicated region
    $region26: #{tpu_custom_call.1} parent=1 // pred_check
      _
    $region27: #{tpu_custom_call.1} parent=1 // pred_check_branch
      %35 = sbr.rel (0) target = $region29
    $region28: #{tpu_custom_call.1} parent=1 // pred_region
      _
    $region29: #{tpu_custom_call.1} parent=1 // pred_fallthru
      _
    // Predicated region
    $region30: #{tpu_custom_call.1} parent=1 // pred_check
      _
    $region31: #{tpu_custom_call.1} parent=1 // pred_check_branch
      %37 = sbr.rel (0) target = $region33
    $region32: #{tpu_custom_call.1} parent=1 // pred_region
      %39 = dma.done [#allocation4], 128
    $region33: #{tpu_custom_call.1} parent=1 // pred_fallthru
      _
    %v40 = vld [vmem:[%s4] sm:$0x1]
    %v42 = vperm.slane %v40, 0
    %v44 = vld [vmem:[#allocation3] sm:$0xff]
    %v45 = vld [vmem:[%s1] sm:$0xff]
    %v46 = vld [vmem:[%s1 + $0x8] sm:$0xff]
    %v47 = vld [vmem:[%s3] sm:$0x1]
    %v49 = vperm.slane %v47, 0
    %vm51 = vcmask 130048
    %v53 = vsel %vm51, %v44, 0
    %55 = vmatpush.msra.mxu0 0.0
    %56 = vmatpush.msra.mxu0 0.0
    %57 = vmatpush.msra.mxu0 0.0
    %58 = vmatpush.msra.mxu0 0.0
    %59 = vmatpush.msra.mxu0 0.0
    %60 = vmatpush.msra.mxu0 0.0
    %61 = vmatpush.msra.mxu0 0.0
    %62 = vmatpush.msra.mxu0 0.0
    %63 = vmatpush.msra.mxu0 0.0
    %64 = vmatpush.msra.mxu0 0.0
    %65 = vmatpush.msra.mxu0 0.0
    %66 = vmatpush.msra.mxu0 0.0
    %67 = vmatpush.msra.mxu0 0.0
    %68 = vmatpush.msra.mxu0 0.0
    %69 = vmatpush.msra.mxu0 %v46
    %70 = vmatpush.msra.mxu0 %v45
    %71 = vmatmul.f32.gmra.mxu0 %v53
    %v72 = vpop.f32.mrf.mxu0
    %v73 = vadd.f32 %v49, %v72
    %74 = vdwg.mxu0
    %v75 = vxor.u32 %v73, 2147483648
    %v76 = vmul.f32 %v75, 1.442695
    %v77 = vpow.pop %v76
    %v78 = vadd.f32 %v77, 1.0
    %v79 = vrcp.pop %v78
    %v80 = vmul.f32 %v78, %v79
    %v81 = vsub.f32 1.0, %v80
    %v82 = vmul.f32 %v79, %v81
    %v83 = vadd.f32 %v79, %v82
    %vm84 = vweird.f32 %v78
    %vm85 = vweird.f32 %v79
    %vm86 = vmor %vm84, %vm85
    %v87 = vsel %vm86, %v79, %v83
    %v88 = vand.u32 2147483647, %v78
    %vm89 = vcmp.eq.f32.partialorder %v88, 8.507059e+37
    %v90 = vand.u32 %v78, 2147483648
    %v91 = vor.u32 1.1754944e-38, %v90
    %v92 = vsel %vm89, %v91, %v87
    %v93 = vmul.f32 1.0, %v92
    %95 = vrot.lane.b32.xlu0 %v73, 32
    %v96 = vpop.permute.xlu0 %95
    %v98 = vmul.f32 %v93, %v96
    %100 = vrot.lane.b32.xlu0 %v98, 64
    %v101 = vpop.permute.xlu0 %100
    %v103 = vadd.f32 %v73, %v101
    %v104 = vtanh.pop %v103
    %v105 = vsub.f32 1.0, %v93
    %107 = vrot.lane.b32.xlu0 %v104, 96
    %v108 = vpop.permute.xlu0 %107
    %v110 = vmul.f32 %v105, %v108
    %v111 = vmul.f32 %v93, 0.0
    %v112 = vadd.f32 %v110, %v111
    %114 = vrot.lane.b32.xlu0 %v112, 96
    %v115 = vpop.permute.xlu0 %114
    %vm117 = vcmask 261120
    %118 = vst.msk [vmem:[#allocation2] sm:$0xff] %vm117, %v115
    %v119 = vld [vmem:[%s2] sm:$0xff]
    %v120 = vld [vmem:[%s2 + $0x8] sm:$0xff]
    %v121 = vld [vmem:[%s2 + $0x10] sm:$0xff]
    %v122 = vld [vmem:[%s2 + $0x18] sm:$0xff]
    %v123 = vsel %vm117, %v115, 0
    %125 = vmatpush.msra.mxu0 0.0
    %126 = vmatpush.msra.mxu0 0.0
    %127 = vmatpush.msra.mxu0 0.0
    %128 = vmatpush.msra.mxu0 0.0
    %129 = vmatpush.msra.mxu0 0.0
    %130 = vmatpush.msra.mxu0 0.0
    %131 = vmatpush.msra.mxu0 0.0
    %132 = vmatpush.msra.mxu0 0.0
    %133 = vmatpush.msra.mxu0 0.0
    %134 = vmatpush.msra.mxu0 0.0
    %135 = vmatpush.msra.mxu0 0.0
    %136 = vmatpush.msra.mxu0 0.0
    %137 = vmatpush.msra.mxu0 %v122
    %138 = vmatpush.msra.mxu0 %v121
    %139 = vmatpush.msra.mxu0 %v120
    %140 = vmatpush.msra.mxu0 %v119
    %141 = vmatmul.f32.gmra.mxu0 %v123
    %v142 = vpop.f32.mrf.mxu0
    %v143 = vadd.f32 %v42, %v142
    %144 = vdwg.mxu0
    %v145 = vxor.u32 %v143, 2147483648
    %v146 = vmul.f32 %v145, 1.442695
    %v147 = vpow.pop %v146
    %v148 = vadd.f32 %v147, 1.0
    %v149 = vrcp.pop %v148
    %v150 = vmul.f32 %v148, %v149
    %v151 = vsub.f32 1.0, %v150
    %v152 = vmul.f32 %v149, %v151
    %v153 = vadd.f32 %v149, %v152
    %vm154 = vweird.f32 %v148
    %vm155 = vweird.f32 %v149
    %vm156 = vmor %vm154, %vm155
    %v157 = vsel %vm156, %v149, %v153
    %v158 = vand.u32 2147483647, %v148
    %vm159 = vcmp.eq.f32.partialorder %v158, 8.507059e+37
    %v160 = vand.u32 %v148, 2147483648
    %v161 = vor.u32 1.1754944e-38, %v160
    %v162 = vsel %vm159, %v161, %v157
    %v163 = vmul.f32 1.0, %v162
    %165 = vrot.lane.b32.xlu0 %v143, 32
    %v166 = vpop.permute.xlu0 %165
    %v168 = vmul.f32 %v163, %v166
    %170 = vrot.lane.b32.xlu0 %v168, 64
    %v171 = vpop.permute.xlu0 %170
    %v173 = vadd.f32 %v143, %v171
    %v174 = vtanh.pop %v173
    %v175 = vsub.f32 1.0, %v163
    %177 = vrot.lane.b32.xlu0 %v174, 96
    %v178 = vpop.permute.xlu0 %177
    %v180 = vmul.f32 %v175, %v178
    %v181 = vmul.f32 %v163, %v112
    %v182 = vadd.f32 %v180, %v181
    %184 = vrot.lane.b32.xlu0 %v182, 96
    %v185 = vpop.permute.xlu0 %184
    %187 = vst.msk [vmem:[#allocation2 + $0x8] sm:$0xff] %vm117, %v185
    %v188 = vld [vmem:[%s2] sm:$0xff]
    %v189 = vld [vmem:[%s2 + $0x8] sm:$0xff]
    %v190 = vld [vmem:[%s2 + $0x10] sm:$0xff]
    %v191 = vld [vmem:[%s2 + $0x18] sm:$0xff]
    %v192 = vsel %vm117, %v185, 0
    %194 = vmatpush.msra.mxu0 0.0
    %195 = vmatpush.msra.mxu0 0.0
    %196 = vmatpush.msra.mxu0 0.0
    %197 = vmatpush.msra.mxu0 0.0
    %198 = vmatpush.msra.mxu0 0.0
    %199 = vmatpush.msra.mxu0 0.0
    %200 = vmatpush.msra.mxu0 0.0
    %201 = vmatpush.msra.mxu0 0.0
    %202 = vmatpush.msra.mxu0 0.0
    %203 = vmatpush.msra.mxu0 0.0
    %204 = vmatpush.msra.mxu0 0.0
    %205 = vmatpush.msra.mxu0 0.0
    %206 = vmatpush.msra.mxu0 %v191
    %207 = vmatpush.msra.mxu0 %v190
    %208 = vmatpush.msra.mxu0 %v189
    %209 = vmatpush.msra.mxu0 %v188
    %210 = vmatmul.f32.gmra.mxu0 %v192
    %v211 = vpop.f32.mrf.mxu0
    %v212 = vadd.f32 %v42, %v211
    %213 = vdwg.mxu0
    %v214 = vxor.u32 %v212, 2147483648
    %v215 = vmul.f32 %v214, 1.442695
    %v216 = vpow.pop %v215
    %v217 = vadd.f32 %v216, 1.0
    %v218 = vrcp.pop %v217
    %v219 = vmul.f32 %v217, %v218
    %v220 = vsub.f32 1.0, %v219
    %v221 = vmul.f32 %v218, %v220
    %v222 = vadd.f32 %v218, %v221
    %vm223 = vweird.f32 %v217
    %vm224 = vweird.f32 %v218
    %vm225 = vmor %vm223, %vm224
    %v226 = vsel %vm225, %v218, %v222
    %v227 = vand.u32 2147483647, %v217
    %vm228 = vcmp.eq.f32.partialorder %v227, 8.507059e+37
    %v229 = vand.u32 %v217, 2147483648
    %v230 = vor.u32 1.1754944e-38, %v229
    %v231 = vsel %vm228, %v230, %v226
    %v232 = vmul.f32 1.0, %v231
    %234 = vrot.lane.b32.xlu0 %v212, 32
    %v235 = vpop.permute.xlu0 %234
    %v237 = vmul.f32 %v232, %v235
    %239 = vrot.lane.b32.xlu0 %v237, 64
    %v240 = vpop.permute.xlu0 %239
    %v242 = vadd.f32 %v212, %v240
    %v243 = vtanh.pop %v242
    %v244 = vsub.f32 1.0, %v232
    %246 = vrot.lane.b32.xlu0 %v243, 96
    %v247 = vpop.permute.xlu0 %246
    %v249 = vmul.f32 %v244, %v247
    %v250 = vmul.f32 %v232, %v182
    %v251 = vadd.f32 %v249, %v250
    %253 = vrot.lane.b32.xlu0 %v251, 96
    %v254 = vpop.permute.xlu0 %253
    %256 = vst.msk [vmem:[#allocation2 + $0x10] sm:$0xff] %vm117, %v254
    %v257 = vld [vmem:[%s2] sm:$0xff]
    %v258 = vld [vmem:[%s2 + $0x8] sm:$0xff]
    %v259 = vld [vmem:[%s2 + $0x10] sm:$0xff]
    %v260 = vld [vmem:[%s2 + $0x18] sm:$0xff]
    %v261 = vsel %vm117, %v254, 0
    %263 = vmatpush.msra.mxu0 0.0
    %264 = vmatpush.msra.mxu0 0.0
    %265 = vmatpush.msra.mxu0 0.0
    %266 = vmatpush.msra.mxu0 0.0
    %267 = vmatpush.msra.mxu0 0.0
    %268 = vmatpush.msra.mxu0 0.0
    %269 = vmatpush.msra.mxu0 0.0
    %270 = vmatpush.msra.mxu0 0.0
    %271 = vmatpush.msra.mxu0 0.0
    %272 = vmatpush.msra.mxu0 0.0
    %273 = vmatpush.msra.mxu0 0.0
    %274 = vmatpush.msra.mxu0 0.0
    %275 = vmatpush.msra.mxu0 %v260
    %276 = vmatpush.msra.mxu0 %v259
    %277 = vmatpush.msra.mxu0 %v258
    %278 = vmatpush.msra.mxu0 %v257
    %279 = vmatmul.f32.gmra.mxu0 %v261
    %v280 = vpop.f32.mrf.mxu0
    %v281 = vadd.f32 %v42, %v280
    %282 = vdwg.mxu0
    %v283 = vxor.u32 %v281, 2147483648
    %v284 = vmul.f32 %v283, 1.442695
    %v285 = vpow.pop %v284
    %v286 = vadd.f32 %v285, 1.0
    %v287 = vrcp.pop %v286
    %v288 = vmul.f32 %v286, %v287
    %v289 = vsub.f32 1.0, %v288
    %v290 = vmul.f32 %v287, %v289
    %v291 = vadd.f32 %v287, %v290
    %vm292 = vweird.f32 %v286
    %vm293 = vweird.f32 %v287
    %vm294 = vmor %vm292, %vm293
    %v295 = vsel %vm294, %v287, %v291
    %v296 = vand.u32 2147483647, %v286
    %vm297 = vcmp.eq.f32.partialorder %v296, 8.507059e+37
    %v298 = vand.u32 %v286, 2147483648
    %v299 = vor.u32 1.1754944e-38, %v298
    %v300 = vsel %vm297, %v299, %v295
    %v301 = vmul.f32 1.0, %v300
    %303 = vrot.lane.b32.xlu0 %v281, 32
    %v304 = vpop.permute.xlu0 %303
    %v306 = vmul.f32 %v301, %v304
    %308 = vrot.lane.b32.xlu0 %v306, 64
    %v309 = vpop.permute.xlu0 %308
    %v311 = vadd.f32 %v281, %v309
    %v312 = vtanh.pop %v311
    %v313 = vsub.f32 1.0, %v301
    %315 = vrot.lane.b32.xlu0 %v312, 96
    %v316 = vpop.permute.xlu0 %315
    %v318 = vmul.f32 %v313, %v316
    %v319 = vmul.f32 %v301, %v251
    %v320 = vadd.f32 %v318, %v319
    %322 = vrot.lane.b32.xlu0 %v320, 96
    %v323 = vpop.permute.xlu0 %322
    %325 = vst.msk [vmem:[#allocation2 + $0x18] sm:$0xff] %vm117, %v323
    %v326 = vld [vmem:[%s2] sm:$0xff]
    %v327 = vld [vmem:[%s2 + $0x8] sm:$0xff]
    %v328 = vld [vmem:[%s2 + $0x10] sm:$0xff]
    %v329 = vld [vmem:[%s2 + $0x18] sm:$0xff]
    %v330 = vsel %vm117, %v323, 0
    %332 = vmatpush.msra.mxu0 0.0
    %333 = vmatpush.msra.mxu0 0.0
    %334 = vmatpush.msra.mxu0 0.0
    %335 = vmatpush.msra.mxu0 0.0
    %336 = vmatpush.msra.mxu0 0.0
    %337 = vmatpush.msra.mxu0 0.0
    %338 = vmatpush.msra.mxu0 0.0
    %339 = vmatpush.msra.mxu0 0.0
    %340 = vmatpush.msra.mxu0 0.0
    %341 = vmatpush.msra.mxu0 0.0
    %342 = vmatpush.msra.mxu0 0.0
    %343 = vmatpush.msra.mxu0 0.0
    %344 = vmatpush.msra.mxu0 %v329
    %345 = vmatpush.msra.mxu0 %v328
    %346 = vmatpush.msra.mxu0 %v327
    %347 = vmatpush.msra.mxu0 %v326
    %348 = vmatmul.f32.gmra.mxu0 %v330
    %v349 = vpop.f32.mrf.mxu0
    %v350 = vadd.f32 %v42, %v349
    %351 = vdwg.mxu0
    %v352 = vxor.u32 %v350, 2147483648
    %v353 = vmul.f32 %v352, 1.442695
    %v354 = vpow.pop %v353
    %v355 = vadd.f32 %v354, 1.0
    %v356 = vrcp.pop %v355
    %v357 = vmul.f32 %v355, %v356
    %v358 = vsub.f32 1.0, %v357
    %v359 = vmul.f32 %v356, %v358
    %v360 = vadd.f32 %v356, %v359
    %vm361 = vweird.f32 %v355
    %vm362 = vweird.f32 %v356
    %vm363 = vmor %vm361, %vm362
    %v364 = vsel %vm363, %v356, %v360
    %v365 = vand.u32 2147483647, %v355
    %vm366 = vcmp.eq.f32.partialorder %v365, 8.507059e+37
    %v367 = vand.u32 %v355, 2147483648
    %v368 = vor.u32 1.1754944e-38, %v367
    %v369 = vsel %vm366, %v368, %v364
    %v370 = vmul.f32 1.0, %v369
    %372 = vrot.lane.b32.xlu0 %v350, 32
    %v373 = vpop.permute.xlu0 %372
    %v375 = vmul.f32 %v370, %v373
    %377 = vrot.lane.b32.xlu0 %v375, 64
    %v378 = vpop.permute.xlu0 %377
    %v380 = vadd.f32 %v350, %v378
    %v381 = vtanh.pop %v380
    %v382 = vsub.f32 1.0, %v370
    %384 = vrot.lane.b32.xlu0 %v381, 96
    %v385 = vpop.permute.xlu0 %384
    %v387 = vmul.f32 %v382, %v385
    %v388 = vmul.f32 %v370, %v320
    %v389 = vadd.f32 %v387, %v388
    %391 = vrot.lane.b32.xlu0 %v389, 96
    %v392 = vpop.permute.xlu0 %391
    %394 = vst.msk [vmem:[#allocation2 + $0x20] sm:$0xff] %vm117, %v392
    %v395 = vld [vmem:[%s2] sm:$0xff]
    %v396 = vld [vmem:[%s2 + $0x8] sm:$0xff]
    %v397 = vld [vmem:[%s2 + $0x10] sm:$0xff]
    %v398 = vld [vmem:[%s2 + $0x18] sm:$0xff]
    %v399 = vsel %vm117, %v392, 0
    %401 = vmatpush.msra.mxu0 0.0
    %402 = vmatpush.msra.mxu0 0.0
    %403 = vmatpush.msra.mxu0 0.0
    %404 = vmatpush.msra.mxu0 0.0
    %405 = vmatpush.msra.mxu0 0.0
    %406 = vmatpush.msra.mxu0 0.0
    %407 = vmatpush.msra.mxu0 0.0
    %408 = vmatpush.msra.mxu0 0.0
    %409 = vmatpush.msra.mxu0 0.0
    %410 = vmatpush.msra.mxu0 0.0
    %411 = vmatpush.msra.mxu0 0.0
    %412 = vmatpush.msra.mxu0 0.0
    %413 = vmatpush.msra.mxu0 %v398
    %414 = vmatpush.msra.mxu0 %v397
    %415 = vmatpush.msra.mxu0 %v396
    %416 = vmatpush.msra.mxu0 %v395
    %417 = vmatmul.f32.gmra.mxu0 %v399
    %v418 = vpop.f32.mrf.mxu0
    %v419 = vadd.f32 %v42, %v418
    %420 = vdwg.mxu0
    %v421 = vxor.u32 %v419, 2147483648
    %v422 = vmul.f32 %v421, 1.442695
    %v423 = vpow.pop %v422
    %v424 = vadd.f32 %v423, 1.0
    %v425 = vrcp.pop %v424
    %v426 = vmul.f32 %v424, %v425
    %v427 = vsub.f32 1.0, %v426
    %v428 = vmul.f32 %v425, %v427
    %v429 = vadd.f32 %v425, %v428
    %vm430 = vweird.f32 %v424
    %vm431 = vweird.f32 %v425
    %vm432 = vmor %vm430, %vm431
    %v433 = vsel %vm432, %v425, %v429
    %v434 = vand.u32 2147483647, %v424
    %vm435 = vcmp.eq.f32.partialorder %v434, 8.507059e+37
    %v436 = vand.u32 %v424, 2147483648
    %v437 = vor.u32 1.1754944e-38, %v436
    %v438 = vsel %vm435, %v437, %v433
    %v439 = vmul.f32 1.0, %v438
    %441 = vrot.lane.b32.xlu0 %v419, 32
    %v442 = vpop.permute.xlu0 %441
    %v444 = vmul.f32 %v439, %v442
    %446 = vrot.lane.b32.xlu0 %v444, 64
    %v447 = vpop.permute.xlu0 %446
    %v449 = vadd.f32 %v419, %v447
    %v450 = vtanh.pop %v449
    %v451 = vsub.f32 1.0, %v439
    %453 = vrot.lane.b32.xlu0 %v450, 96
    %v454 = vpop.permute.xlu0 %453
    %v456 = vmul.f32 %v451, %v454
    %v457 = vmul.f32 %v439, %v389
    %v458 = vadd.f32 %v456, %v457
    %460 = vrot.lane.b32.xlu0 %v458, 96
    %v461 = vpop.permute.xlu0 %460
    %463 = vst.msk [vmem:[#allocation2 + $0x28] sm:$0xff] %vm117, %v461
    %v464 = vld [vmem:[%s2] sm:$0xff]
    %v465 = vld [vmem:[%s2 + $0x8] sm:$0xff]
    %v466 = vld [vmem:[%s2 + $0x10] sm:$0xff]
    %v467 = vld [vmem:[%s2 + $0x18] sm:$0xff]
    %v468 = vsel %vm117, %v461, 0
    %470 = vmatpush.msra.mxu0 0.0
    %471 = vmatpush.msra.mxu0 0.0
    %472 = vmatpush.msra.mxu0 0.0
    %473 = vmatpush.msra.mxu0 0.0
    %474 = vmatpush.msra.mxu0 0.0
    %475 = vmatpush.msra.mxu0 0.0
    %476 = vmatpush.msra.mxu0 0.0
    %477 = vmatpush.msra.mxu0 0.0
    %478 = vmatpush.msra.mxu0 0.0
    %479 = vmatpush.msra.mxu0 0.0
    %480 = vmatpush.msra.mxu0 0.0
    %481 = vmatpush.msra.mxu0 0.0
    %482 = vmatpush.msra.mxu0 %v467
    %483 = vmatpush.msra.mxu0 %v466
    %484 = vmatpush.msra.mxu0 %v465
    %485 = vmatpush.msra.mxu0 %v464
    %486 = vmatmul.f32.gmra.mxu0 %v468
    %v487 = vpop.f32.mrf.mxu0
    %v488 = vadd.f32 %v42, %v487
    %489 = vdwg.mxu0
    %v490 = vxor.u32 %v488, 2147483648
    %v491 = vmul.f32 %v490, 1.442695
    %v492 = vpow.pop %v491
    %v493 = vadd.f32 %v492, 1.0
    %v494 = vrcp.pop %v493
    %v495 = vmul.f32 %v493, %v494
    %v496 = vsub.f32 1.0, %v495
    %v497 = vmul.f32 %v494, %v496
    %v498 = vadd.f32 %v494, %v497
    %vm499 = vweird.f32 %v493
    %vm500 = vweird.f32 %v494
    %vm501 = vmor %vm499, %vm500
    %v502 = vsel %vm501, %v494, %v498
    %v503 = vand.u32 2147483647, %v493
    %vm504 = vcmp.eq.f32.partialorder %v503, 8.507059e+37
    %v505 = vand.u32 %v493, 2147483648
    %v506 = vor.u32 1.1754944e-38, %v505
    %v507 = vsel %vm504, %v506, %v502
    %v508 = vmul.f32 1.0, %v507
    %510 = vrot.lane.b32.xlu0 %v488, 32
    %v511 = vpop.permute.xlu0 %510
    %v513 = vmul.f32 %v508, %v511
    %515 = vrot.lane.b32.xlu0 %v513, 64
    %v516 = vpop.permute.xlu0 %515
    %v518 = vadd.f32 %v488, %v516
    %v519 = vtanh.pop %v518
    %v520 = vsub.f32 1.0, %v508
    %522 = vrot.lane.b32.xlu0 %v519, 96
    %v523 = vpop.permute.xlu0 %522
    %v525 = vmul.f32 %v520, %v523
    %v526 = vmul.f32 %v508, %v458
    %v527 = vadd.f32 %v525, %v526
    %529 = vrot.lane.b32.xlu0 %v527, 96
    %v530 = vpop.permute.xlu0 %529
    %532 = vst.msk [vmem:[#allocation2 + $0x30] sm:$0xff] %vm117, %v530
    %v533 = vld [vmem:[%s2] sm:$0xff]
    %v534 = vld [vmem:[%s2 + $0x8] sm:$0xff]
    %v535 = vld [vmem:[%s2 + $0x10] sm:$0xff]
    %v536 = vld [vmem:[%s2 + $0x18] sm:$0xff]
    %v537 = vsel %vm117, %v530, 0
    %539 = vmatpush.msra.mxu0 0.0
    %540 = vmatpush.msra.mxu0 0.0
    %541 = vmatpush.msra.mxu0 0.0
    %542 = vmatpush.msra.mxu0 0.0
    %543 = vmatpush.msra.mxu0 0.0
    %544 = vmatpush.msra.mxu0 0.0
    %545 = vmatpush.msra.mxu0 0.0
    %546 = vmatpush.msra.mxu0 0.0
    %547 = vmatpush.msra.mxu0 0.0
    %548 = vmatpush.msra.mxu0 0.0
    %549 = vmatpush.msra.mxu0 0.0
    %550 = vmatpush.msra.mxu0 0.0
    %551 = vmatpush.msra.mxu0 %v536
    %552 = vmatpush.msra.mxu0 %v535
    %553 = vmatpush.msra.mxu0 %v534
    %554 = vmatpush.msra.mxu0 %v533
    %555 = vmatmul.f32.gmra.mxu0 %v537
    %v556 = vpop.f32.mrf.mxu0
    %v557 = vadd.f32 %v42, %v556
    %558 = vdwg.mxu0
    %v559 = vxor.u32 %v557, 2147483648
    %v560 = vmul.f32 %v559, 1.442695
    %v561 = vpow.pop %v560
    %v562 = vadd.f32 %v561, 1.0
    %v563 = vrcp.pop %v562
    %v564 = vmul.f32 %v562, %v563
    %v565 = vsub.f32 1.0, %v564
    %v566 = vmul.f32 %v563, %v565
    %v567 = vadd.f32 %v563, %v566
    %vm568 = vweird.f32 %v562
    %vm569 = vweird.f32 %v563
    %vm570 = vmor %vm568, %vm569
    %v571 = vsel %vm570, %v563, %v567
    %v572 = vand.u32 2147483647, %v562
    %vm573 = vcmp.eq.f32.partialorder %v572, 8.507059e+37
    %v574 = vand.u32 %v562, 2147483648
    %v575 = vor.u32 1.1754944e-38, %v574
    %v576 = vsel %vm573, %v575, %v571
    %v577 = vmul.f32 1.0, %v576
    %579 = vrot.lane.b32.xlu0 %v557, 32
    %v580 = vpop.permute.xlu0 %579
    %v582 = vmul.f32 %v577, %v580
    %584 = vrot.lane.b32.xlu0 %v582, 64
    %v585 = vpop.permute.xlu0 %584
    %v587 = vadd.f32 %v557, %v585
    %v588 = vtanh.pop %v587
    %v589 = vsub.f32 1.0, %v577
    %591 = vrot.lane.b32.xlu0 %v588, 96
    %v592 = vpop.permute.xlu0 %591
    %v594 = vmul.f32 %v589, %v592
    %v595 = vmul.f32 %v577, %v527
    %v596 = vadd.f32 %v594, %v595
    %598 = vrot.lane.b32.xlu0 %v596, 96
    %v599 = vpop.permute.xlu0 %598
    %601 = vst.msk [vmem:[#allocation2 + $0x38] sm:$0xff] %vm117, %v599
    %v602 = vld [vmem:[#allocation2] sm:$0xff]
    %v603 = vld [vmem:[#allocation2 + $0x8] sm:$0xff]
    %v604 = vld [vmem:[#allocation2 + $0x10] sm:$0xff]
    %v605 = vld [vmem:[#allocation2 + $0x18] sm:$0xff]
    %v606 = vld [vmem:[#allocation2 + $0x20] sm:$0xff]
    %v607 = vld [vmem:[#allocation2 + $0x28] sm:$0xff]
    %v608 = vld [vmem:[#allocation2 + $0x30] sm:$0xff]
    %v609 = vld [vmem:[#allocation2 + $0x38] sm:$0xff]
    %v610 = vld [vmem:[%s5] sm:$0xff]
    %v611 = vld [vmem:[%s5 + $0x8] sm:$0xff]
    %v612 = vld [vmem:[%s5 + $0x10] sm:$0xff]
    %v613 = vld [vmem:[%s5 + $0x18] sm:$0xff]
    %v614 = vld [vmem:[%s6] sm:$0x1]
    %v616 = vperm.slane %v614, 0
    %v619 = vsel %vm117, %v602, 0
    %v622 = vsel %vm117, %v603, 0
    %v625 = vsel %vm117, %v604, 0
    %v628 = vsel %vm117, %v605, 0
    %v631 = vsel %vm117, %v606, 0
    %v634 = vsel %vm117, %v607, 0
    %v637 = vsel %vm117, %v608, 0
    %v640 = vsel %vm117, %v609, 0
    %642 = vmatpush.msra.mxu0 0.0
    %643 = vmatpush.msra.mxu0 0.0
    %644 = vmatpush.msra.mxu0 0.0
    %645 = vmatpush.msra.mxu0 0.0
    %646 = vmatpush.msra.mxu0 0.0
    %647 = vmatpush.msra.mxu0 0.0
    %648 = vmatpush.msra.mxu0 0.0
    %649 = vmatpush.msra.mxu0 0.0
    %650 = vmatpush.msra.mxu0 0.0
    %651 = vmatpush.msra.mxu0 0.0
    %652 = vmatpush.msra.mxu0 0.0
    %653 = vmatpush.msra.mxu0 0.0
    %654 = vmatpush.msra.mxu0 %v613
    %655 = vmatpush.msra.mxu0 %v612
    %656 = vmatpush.msra.mxu0 %v611
    %657 = vmatpush.msra.mxu0 %v610
    %658 = vmatmul.f32.gmra.mxu0 %v619
    %v659 = vpop.f32.mrf.mxu0
    %v660 = vadd.f32 %v616, %v659
    %661 = vmatmul.f32.gmra.mxu0 %v622
    %v662 = vpop.f32.mrf.mxu0
    %v663 = vadd.f32 %v616, %v662
    %664 = vmatmul.f32.gmra.mxu0 %v625
    %v665 = vpop.f32.mrf.mxu0
    %v666 = vadd.f32 %v616, %v665
    %667 = vmatmul.f32.gmra.mxu0 %v628
    %v668 = vpop.f32.mrf.mxu0
    %v669 = vadd.f32 %v616, %v668
    %670 = vmatmul.f32.gmra.mxu0 %v631
    %v671 = vpop.f32.mrf.mxu0
    %v672 = vadd.f32 %v616, %v671
    %673 = vmatmul.f32.gmra.mxu0 %v634
    %v674 = vpop.f32.mrf.mxu0
    %v675 = vadd.f32 %v616, %v674
    %676 = vmatmul.f32.gmra.mxu0 %v637
    %v677 = vpop.f32.mrf.mxu0
    %v678 = vadd.f32 %v616, %v677
    %679 = vmatmul.f32.gmra.mxu0 %v640
    %v680 = vpop.f32.mrf.mxu0
    %v681 = vadd.f32 %v616, %v680
    %682 = vdwg.mxu0
    %683 = vst.msk [vmem:[%s7] sm:$0xff] %vm51, %v660
    %684 = vst.msk [vmem:[%s7 + $0x8] sm:$0xff] %vm51, %v663
    %685 = vst.msk [vmem:[%s7 + $0x10] sm:$0xff] %vm51, %v666
    %686 = vst.msk [vmem:[%s7 + $0x18] sm:$0xff] %vm51, %v669
    %687 = vst.msk [vmem:[%s7 + $0x20] sm:$0xff] %vm51, %v672
    %688 = vst.msk [vmem:[%s7 + $0x28] sm:$0xff] %vm51, %v675
    %689 = vst.msk [vmem:[%s7 + $0x30] sm:$0xff] %vm51, %v678
    %690 = vst.msk [vmem:[%s7 + $0x38] sm:$0xff] %vm51, %v681
    // Predicated region
    $region34: #{tpu_custom_call.1} parent=1 // pred_check
      _
    $region35: #{tpu_custom_call.1} parent=1 // pred_check_branch
      %692 = sbr.rel (0) target = $region37
    $region36: #{tpu_custom_call.1} parent=1 // pred_region
      _
    $region37: #{tpu_custom_call.1} parent=1 // pred_fallthru
      _
    // Predicated region
    $region38: #{tpu_custom_call.1} parent=1 // pred_check
      _
    $region39: #{tpu_custom_call.1} parent=1 // pred_check_branch
      %694 = sbr.rel (0) target = $region41
    $region40: #{tpu_custom_call.1} parent=1 // pred_region
      _
    $region41: #{tpu_custom_call.1} parent=1 // pred_fallthru
      _
    %695 = vsyncpa [#allocation4], 1

</llo_original>
